<compile_context>
chip_gen: v5e
topology: v5e:2x2
jax: 0.10.0
libtpu: 0.0.40
codegen_flags: <defaults>
</compile_context>

<pallas_src>
import jax
import jax.numpy as jnp
from jax import lax
from jax.experimental import pallas as pl
from jax.experimental.pallas import tpu as pltpu

_LN_EPS = 1e-5   # nn.LayerNorm default eps
_BETA = 0.25     # VectorQuantizer commitment coefficient
_BIG = 1e30      # sentinel distance for padded codebook entries

# rows of the fused parameter slab
_ROWS = dict(eb1=0, eg1=1, et1=2, eb2=3, eg2=4, et2=5, eb3=6,
             db1=7, dg1=8, dt1=9, db2=10, dg2=11, dt2=12, db3=13, c2=14)
_SLAB_ROWS = 16  # padded to a multiple of 8 sublanes


def _round_up(n, m):
    return ((n + m - 1) // m) * m


# --------------------------------- kernel ---------------------------------
def _make_kernel(*, hid, hid_p, lat_p, d_in_p, K_p, BT, B):
    """Build the fused VQ-VAE kernel for fixed (padded) dimensions."""

    def layernorm(h, g, b, real_dim):
        # Feature dim is zero-padded; padded lanes of h are exactly 0 and padded
        # gamma/beta are 0, so one-pass stats over real_dim are exact.
        mu = jnp.sum(h, axis=-1, keepdims=True) * (1.0 / real_dim)
        ex2 = jnp.sum(h * h, axis=-1, keepdims=True) * (1.0 / real_dim)
        var = jnp.maximum(ex2 - mu * mu, 0.0)
        return (h - mu) * lax.rsqrt(var + _LN_EPS) * g + b

    def mlp(h, w1, b1, g1, t1, w2, b2, g2, t2, w3, b3):
        # Linear -> LN -> ReLU -> (Dropout=id) -> Linear -> LN -> ReLU -> (Dropout=id) -> Linear
        h = jnp.maximum(layernorm(
            jnp.dot(h, w1[...], preferred_element_type=jnp.float32) + b1, g1, t1, hid), 0.0)
        h = jnp.maximum(layernorm(
            jnp.dot(h, w2[...], preferred_element_type=jnp.float32) + b2, g2, t2, hid), 0.0)
        return jnp.dot(h, w3[...], preferred_element_type=jnp.float32) + b3

    def kernel(x_ref, vec_ref, ew1, ew2, ew3, cbt_ref, cb_ref, dw1, dw2, dw3,
               recon_ref, idx_ref, loss_ref):
        x = x_ref[...].astype(jnp.float32)                      # (BT, d_in_p)

        def row(name, width):                                   # static slab slice
            r = _ROWS[name]
            return vec_ref[r:r + 1, :width]

        # ------------------------------ Encoder ------------------------------
        z = mlp(x,
                ew1, row("eb1", hid_p), row("eg1", hid_p), row("et1", hid_p),
                ew2, row("eb2", hid_p), row("eg2", hid_p), row("et2", hid_p),
                ew3, row("eb3", lat_p))                         # (BT, lat_p)

        # -------------------------- Vector quantizer -------------------------
        # argmin_k ||z - c_k||^2 == argmin_k (||c_k||^2 - 2 z.c_k); z^2 dropped.
        cross = jnp.dot(z, cbt_ref[...],
                        preferred_element_type=jnp.float32)     # (BT, K_p)
        dist = row("c2", K_p) - 2.0 * cross                     # padded codes -> +BIG
        min_d = jnp.min(dist, axis=1, keepdims=True)
        col = lax.broadcasted_iota(jnp.int32, dist.shape, 1)
        idx = jnp.min(jnp.where(dist == min_d, col, K_p),
                      axis=1, keepdims=True)                    # first-match tie break
        idx_ref[...] = idx                                      # (BT, 1) int32

        onehot = (col == idx).astype(jnp.float32)               # (BT, K_p)
        z_q = jnp.dot(onehot, cb_ref[...],
                      preferred_element_type=jnp.float32)       # (BT, lat_p)

        # ------------------------------ Decoder ------------------------------
        # Straight-through: forward value of z + (z_q - z).detach() is z_q.
        recon = mlp(z_q,
                    dw1, row("db1", hid_p), row("dg1", hid_p), row("dt1", hid_p),
                    dw2, row("db2", hid_p), row("dg2", hid_p), row("dt2", hid_p),
                    dw3, row("db3", d_in_p))                    # (BT, d_in_p)
        recon_ref[...] = recon.astype(recon_ref.dtype)

        # ----------------------- per-tile loss partial sums ------------------
        tile = pl.program_id(0)
        rows_g = tile * BT + lax.broadcasted_iota(jnp.int32, (BT, 1), 0)
        rmask = (rows_g < B).astype(jnp.float32)                # mask padded batch rows

        rd = recon - x                                          # padded lanes are 0
        vd = z - z_q
        rsum = jnp.sum(jnp.sum(rd * rd, axis=1, keepdims=True) * rmask)
        vsum = jnp.sum(jnp.sum(vd * vd, axis=1, keepdims=True) * rmask)

        lanes = lax.broadcasted_iota(jnp.int32, (1, 8, 128), 2)
        loss_ref[...] = jnp.where(lanes == 0, rsum,
                                  jnp.where(lanes == 1, vsum, 0.0))

    return kernel


# ------------------------ parameter packing / padding -----------------------
def _pack_params(params, d_in_p, hid_p, lat_p, K_p):
    (ew1, eb1, eg1, ebt1, ew2, eb2, eg2, ebt2, ew3, eb3, cb,
     dw1, db1, dg1, dbt1, dw2, db2, dg2, dbt2, dw3, db3) = params
    maxw = max(d_in_p, hid_p, lat_p, K_p)

    def pad_mat(w, rp, cp):
        r, c = w.shape
        return jnp.pad(w.astype(jnp.float32), ((0, rp - r), (0, cp - c)))

    def vrow(v, fill=0.0):
        v = jnp.asarray(v, jnp.float32).reshape(-1)
        out = jnp.full((maxw,), fill, jnp.float32)
        return out.at[:v.shape[0]].set(v)

    c2 = jnp.sum(cb.astype(jnp.float32) ** 2, axis=1)           # (K,) precomputed

    rows = [jnp.zeros((maxw,), jnp.float32)] * _SLAB_ROWS
    rows[_ROWS["eb1"]] = vrow(eb1); rows[_ROWS["eg1"]] = vrow(eg1); rows[_ROWS["et1"]] = vrow(ebt1)
    rows[_ROWS["eb2"]] = vrow(eb2); rows[_ROWS["eg2"]] = vrow(eg2); rows[_ROWS["et2"]] = vrow(ebt2)
    rows[_ROWS["eb3"]] = vrow(eb3)
    rows[_ROWS["db1"]] = vrow(db1); rows[_ROWS["dg1"]] = vrow(dg1); rows[_ROWS["dt1"]] = vrow(dbt1)
    rows[_ROWS["db2"]] = vrow(db2); rows[_ROWS["dg2"]] = vrow(dg2); rows[_ROWS["dt2"]] = vrow(dbt2)
    rows[_ROWS["db3"]] = vrow(db3)
    rows[_ROWS["c2"]] = vrow(c2, fill=_BIG)                     # padded codes never win argmin
    slab = jnp.stack(rows)                                      # (16, maxw)

    mats = (pad_mat(ew1, d_in_p, hid_p),
            pad_mat(ew2, hid_p, hid_p),
            pad_mat(ew3, hid_p, lat_p),
            pad_mat(cb.T, lat_p, K_p),   # transposed codebook for the cross matmul
            pad_mat(cb, K_p, lat_p),     # (K,D) copy for the one-hot gather
            pad_mat(dw1, lat_p, hid_p),
            pad_mat(dw2, hid_p, hid_p),
            pad_mat(dw3, hid_p, d_in_p))
    return slab, mats


# -------------------------------- wrapper ---------------------------------
def vqvae_forward(x, params, *, batch_tile=256):
    B, d_in = x.shape
    hidden = params[0].shape[1]     # ew1: (d_in, hidden)
    lat_dim = params[8].shape[1]    # ew3: (hidden, lat_dim)
    K = params[10].shape[0]         # codebook: (K, lat_dim)

    d_in_p = _round_up(d_in, 128)
    hid_p = _round_up(hidden, 128)
    lat_p = _round_up(lat_dim, 128)
    K_p = _round_up(K, 128)

    BT = min(batch_tile, _round_up(B, 8))
    B_pad = _round_up(B, BT)
    num_tiles = B_pad // BT

    slab, mats = _pack_params(params, d_in_p, hid_p, lat_p, K_p)
    maxw = slab.shape[1]

    x_pad = jnp.zeros((B_pad, d_in_p), jnp.float32).at[:B, :d_in].set(
        x.astype(jnp.float32))

    kernel = _make_kernel(hid=hidden, hid_p=hid_p, lat_p=lat_p, d_in_p=d_in_p,
                          K_p=K_p, BT=BT, B=B)

    in_specs = [
        pl.BlockSpec((BT, d_in_p), lambda i: (i, 0)),            # x (batch-tiled)
        pl.BlockSpec((_SLAB_ROWS, maxw), lambda i: (0, 0)),      # fused vector slab
        pl.BlockSpec((d_in_p, hid_p), lambda i: (0, 0)),         # ew1
        pl.BlockSpec((hid_p, hid_p), lambda i: (0, 0)),          # ew2
        pl.BlockSpec((hid_p, lat_p), lambda i: (0, 0)),          # ew3
        pl.BlockSpec((lat_p, K_p), lambda i: (0, 0)),            # codebook^T
        pl.BlockSpec((K_p, lat_p), lambda i: (0, 0)),            # codebook
        pl.BlockSpec((lat_p, hid_p), lambda i: (0, 0)),          # dw1
        pl.BlockSpec((hid_p, hid_p), lambda i: (0, 0)),          # dw2
        pl.BlockSpec((hid_p, d_in_p), lambda i: (0, 0)),         # dw3
    ]
    out_shape = (
        jax.ShapeDtypeStruct((B_pad, d_in_p), jnp.float32),      # recon (lane-dense)
        jax.ShapeDtypeStruct((B_pad, 1), jnp.int32),             # idx
        jax.ShapeDtypeStruct((num_tiles, 8, 128), jnp.float32),  # per-tile loss sums
    )
    out_specs = (
        pl.BlockSpec((BT, d_in_p), lambda i: (i, 0)),
        pl.BlockSpec((BT, 1), lambda i: (i, 0)),
        pl.BlockSpec((1, 8, 128), lambda i: (i, 0, 0)),
    )

    fn = pl.pallas_call(
        kernel,
        grid=(num_tiles,),
        in_specs=in_specs,
        out_specs=out_specs,
        out_shape=out_shape,
        compiler_params=pltpu.CompilerParams(
            dimension_semantics=("parallel",)),                  # megacore-shardable
    )
    recon_p, idx_p, loss_parts = fn(x_pad, slab, *mats)

    recon = recon_p[:B, :d_in]
    idx = idx_p[:B, 0]
    rsum = jnp.sum(loss_parts[:, 0, 0])
    vsum = jnp.sum(loss_parts[:, 0, 1])
    recon_loss = rsum / float(B * d_in)
    vq_loss = (1.0 + _BETA) * (vsum / float(B * lat_dim))       # codebook + beta*commitment
    total_loss = recon_loss + vq_loss
    return recon, idx, total_loss, recon_loss


# ------------------------ init + pure-JAX reference ------------------------
def init_params(key, input_dim, hidden, lat_dim, num_codes):
    ks = jax.random.split(key, 8)

    def lin(k, fan_in, fan_out):
        kw, kb = jax.random.split(k)
        bound = float(1.0 / (fan_in ** 0.5))
        w = jax.random.uniform(kw, (fan_in, fan_out), jnp.float32, -bound, bound)
        b = jax.random.uniform(kb, (fan_out,), jnp.float32, -bound, bound)
        return w, b

    def ln(dim):
        return jnp.ones((dim,), jnp.float32), jnp.zeros((dim,), jnp.float32)

    ew1, eb1 = lin(ks[0], input_dim, hidden); eg1, ebt1 = ln(hidden)
    ew2, eb2 = lin(ks[1], hidden, hidden);    eg2, ebt2 = ln(hidden)
    ew3, eb3 = lin(ks[2], hidden, lat_dim)
    cb = 0.1 * jax.random.normal(ks[3], (num_codes, lat_dim), jnp.float32)
    dw1, db1 = lin(ks[4], lat_dim, hidden);   dg1, dbt1 = ln(hidden)
    dw2, db2 = lin(ks[5], hidden, hidden);    dg2, dbt2 = ln(hidden)
    dw3, db3 = lin(ks[6], hidden, input_dim)

    return (ew1, eb1, eg1, ebt1, ew2, eb2, eg2, ebt2, ew3, eb3,
            cb,
            dw1, db1, dg1, dbt1, dw2, db2, dg2, dbt2, dw3, db3)


def vqvae_reference(x, params):
    (ew1, eb1, eg1, ebt1, ew2, eb2, eg2, ebt2, ew3, eb3, cb,
     dw1, db1, dg1, dbt1, dw2, db2, dg2, dbt2, dw3, db3) = params

    def ln(h, g, b):
        mu = jnp.mean(h, axis=-1, keepdims=True)
        var = jnp.mean((h - mu) ** 2, axis=-1, keepdims=True)
        return (h - mu) / jnp.sqrt(var + _LN_EPS) * g + b

    def mlp(h, w1, b1, g1, t1, w2, b2, g2, t2, w3, b3):
        h = jax.nn.relu(ln(h @ w1 + b1, g1, t1))
        h = jax.nn.relu(ln(h @ w2 + b2, g2, t2))
        return h @ w3 + b3

    z = mlp(x, ew1, eb1, eg1, ebt1, ew2, eb2, eg2, ebt2, ew3, eb3)
    d = jnp.sum(z ** 2, 1, keepdims=True) + jnp.sum(cb ** 2, 1)[None, :] - 2.0 * z @ cb.T
    idx = jnp.argmin(d, axis=1).astype(jnp.int32)
    z_q = cb[idx]
    vq_loss = (1.0 + _BETA) * jnp.mean((z - z_q) ** 2)
    recon = mlp(z_q, dw1, db1, dg1, dbt1, dw2, db2, dg2, dbt2, dw3, db3)
    recon_loss = jnp.mean((recon - x) ** 2)
    return recon, idx, recon_loss + vq_loss, recon_loss


if __name__ == "__main__":
    B, input_dim, hidden, latent_bits = 8, 64, 32, 4
    lat_dim = max(64, input_dim // 4, latent_bits * 4)   # = 64
    num_codes = 2 ** latent_bits                          # = 16

    key = jax.random.PRNGKey(0)
    kx, kp = jax.random.split(key)
    x = jax.random.normal(kx, (B, input_dim), jnp.float32)
    params = init_params(kp, input_dim, hidden, lat_dim, num_codes)

    fwd = jax.jit(vqvae_forward)
    recon, idx, total_loss, recon_loss = jax.block_until_ready(fwd(x, params))

    assert recon.shape == (B, input_dim) and recon.dtype == jnp.float32
    assert idx.shape == (B,) and idx.dtype == jnp.int32
    assert bool(jnp.isfinite(total_loss)) and bool(jnp.isfinite(recon_loss))

    # sanity-check against a pure-JAX reference of the PyTorch forward
    r_ref, i_ref, t_ref, rl_ref = vqvae_reference(x, params)
    assert bool(jnp.array_equal(idx, i_ref))
    assert bool(jnp.allclose(recon, r_ref, rtol=1e-3, atol=1e-3))
    assert bool(jnp.allclose(total_loss, t_ref, rtol=1e-3, atol=1e-3))
    assert bool(jnp.allclose(recon_loss, rl_ref, rtol=1e-3, atol=1e-3))

    print("KERNEL_OK")
</pallas_src>

<mosaic_0001>
module attributes {stable_mosaic.version = 11 : i64} {
  func.func @kernel(%arg0: i32, %arg1: memref<8x128xf32, #tpu.memory_space<vmem>>, %arg2: memref<16x128xf32, #tpu.memory_space<vmem>>, %arg3: memref<128x128xf32, #tpu.memory_space<vmem>>, %arg4: memref<128x128xf32, #tpu.memory_space<vmem>>, %arg5: memref<128x128xf32, #tpu.memory_space<vmem>>, %arg6: memref<128x128xf32, #tpu.memory_space<vmem>>, %arg7: memref<128x128xf32, #tpu.memory_space<vmem>>, %arg8: memref<128x128xf32, #tpu.memory_space<vmem>>, %arg9: memref<128x128xf32, #tpu.memory_space<vmem>>, %arg10: memref<128x128xf32, #tpu.memory_space<vmem>>, %arg11: memref<8x128xf32, #tpu.memory_space<vmem>>, %arg12: memref<8x1xi32, #tpu.memory_space<vmem>>, %arg13: memref<1x8x128xf32, #tpu.memory_space<vmem>>) attributes {dimension_semantics = [#tpu.dimension_semantics<parallel>], iteration_bounds = array<i64: 1>, scalar_prefetch = 0 : i64, scratch_operands = 0 : i64, tpu.core_type = #tpu.core_type<tc>, window_params = [{transform_indices = @transform_0, window_bounds = array<i64: 8, 128>}, {pipeline_mode = #tpu.pipeline_mode<synchronous>, transform_indices = @transform_1, window_bounds = array<i64: 16, 128>}, {pipeline_mode = #tpu.pipeline_mode<synchronous>, transform_indices = @transform_2, window_bounds = array<i64: 128, 128>}, {pipeline_mode = #tpu.pipeline_mode<synchronous>, transform_indices = @transform_3, window_bounds = array<i64: 128, 128>}, {pipeline_mode = #tpu.pipeline_mode<synchronous>, transform_indices = @transform_4, window_bounds = array<i64: 128, 128>}, {pipeline_mode = #tpu.pipeline_mode<synchronous>, transform_indices = @transform_5, window_bounds = array<i64: 128, 128>}, {pipeline_mode = #tpu.pipeline_mode<synchronous>, transform_indices = @transform_6, window_bounds = array<i64: 128, 128>}, {pipeline_mode = #tpu.pipeline_mode<synchronous>, transform_indices = @transform_7, window_bounds = array<i64: 128, 128>}, {pipeline_mode = #tpu.pipeline_mode<synchronous>, transform_indices = @transform_8, window_bounds = array<i64: 128, 128>}, {pipeline_mode = #tpu.pipeline_mode<synchronous>, transform_indices = @transform_9, window_bounds = array<i64: 128, 128>}, {transform_indices = @transform_10, window_bounds = array<i64: 8, 128>}, {transform_indices = @transform_11, window_bounds = array<i64: 8, 1>}, {transform_indices = @transform_12, window_bounds = array<i64: 1, 8, 128>}]} {
    %c0 = arith.constant 0 : index
    %c0_0 = arith.constant 0 : index
    %0 = vector.load %arg1[%c0, %c0_0] : memref<8x128xf32, #tpu.memory_space<vmem>>, vector<8x128xf32>
    %c0_1 = arith.constant 0 : index
    %c0_2 = arith.constant 0 : index
    %1 = vector.load %arg2[%c0_1, %c0_2] : memref<16x128xf32, #tpu.memory_space<vmem>>, vector<1x128xf32>
    %c1 = arith.constant 1 : index
    %c0_3 = arith.constant 0 : index
    %2 = vector.load %arg2[%c1, %c0_3] : memref<16x128xf32, #tpu.memory_space<vmem>>, vector<1x128xf32>
    %c2 = arith.constant 2 : index
    %c0_4 = arith.constant 0 : index
    %3 = vector.load %arg2[%c2, %c0_4] : memref<16x128xf32, #tpu.memory_space<vmem>>, vector<1x128xf32>
    %c3 = arith.constant 3 : index
    %c0_5 = arith.constant 0 : index
    %4 = vector.load %arg2[%c3, %c0_5] : memref<16x128xf32, #tpu.memory_space<vmem>>, vector<1x128xf32>
    %c4 = arith.constant 4 : index
    %c0_6 = arith.constant 0 : index
    %5 = vector.load %arg2[%c4, %c0_6] : memref<16x128xf32, #tpu.memory_space<vmem>>, vector<1x128xf32>
    %c5 = arith.constant 5 : index
    %c0_7 = arith.constant 0 : index
    %6 = vector.load %arg2[%c5, %c0_7] : memref<16x128xf32, #tpu.memory_space<vmem>>, vector<1x128xf32>
    %c6 = arith.constant 6 : index
    %c0_8 = arith.constant 0 : index
    %7 = vector.load %arg2[%c6, %c0_8] : memref<16x128xf32, #tpu.memory_space<vmem>>, vector<1x128xf32>
    %c0_9 = arith.constant 0 : index
    %c0_10 = arith.constant 0 : index
    %8 = vector.load %arg3[%c0_9, %c0_10] : memref<128x128xf32, #tpu.memory_space<vmem>>, vector<128x128xf32>
    %cst = arith.constant dense<0.000000e+00> : vector<8x128xf32>
    %9 = tpu.matmul %0, %8, %cst {dimension_numbers = #tpu.dot_dimension_numbers<[1], [0], [0], [1], [0, 0, 1, 1], [], []>} : vector<8x128xf32>, vector<128x128xf32>, vector<8x128xf32> -> vector<8x128xf32>
    %10 = vector.broadcast %1 : vector<1x128xf32> to vector<8x128xf32>
    %11 = arith.addf %9, %10 : vector<8x128xf32>
    %cst_11 = arith.constant dense<0.000000e+00> : vector<8xf32>
    %12 = vector.multi_reduction <add>, %11, %cst_11 [1] : vector<8x128xf32> to vector<8xf32>
    %13 = vector.shape_cast %12 : vector<8xf32> to vector<8x1xf32>
    %cst_12 = arith.constant 3.125000e-02 : f32
    %14 = vector.broadcast %cst_12 : f32 to vector<8x1xf32>
    %15 = arith.mulf %13, %14 : vector<8x1xf32>
    %16 = arith.mulf %11, %11 : vector<8x128xf32>
    %cst_13 = arith.constant dense<0.000000e+00> : vector<8xf32>
    %17 = vector.multi_reduction <add>, %16, %cst_13 [1] : vector<8x128xf32> to vector<8xf32>
    %18 = vector.shape_cast %17 : vector<8xf32> to vector<8x1xf32>
    %cst_14 = arith.constant 3.125000e-02 : f32
    %19 = vector.broadcast %cst_14 : f32 to vector<8x1xf32>
    %20 = arith.mulf %18, %19 : vector<8x1xf32>
    %21 = arith.mulf %15, %15 : vector<8x1xf32>
    %22 = arith.subf %20, %21 : vector<8x1xf32>
    %cst_15 = arith.constant 0.000000e+00 : f32
    %23 = vector.broadcast %cst_15 : f32 to vector<8x1xf32>
    %24 = arith.maximumf %22, %23 : vector<8x1xf32>
    %25 = vector.broadcast %15 : vector<8x1xf32> to vector<8x128xf32>
    %26 = arith.subf %11, %25 : vector<8x128xf32>
    %cst_16 = arith.constant 9.99999974E-6 : f32
    %27 = vector.broadcast %cst_16 : f32 to vector<8x1xf32>
    %28 = arith.addf %24, %27 : vector<8x1xf32>
    %29 = math.rsqrt %28 : vector<8x1xf32>
    %30 = vector.broadcast %29 : vector<8x1xf32> to vector<8x128xf32>
    %31 = arith.mulf %26, %30 : vector<8x128xf32>
    %32 = vector.broadcast %2 : vector<1x128xf32> to vector<8x128xf32>
    %33 = arith.mulf %31, %32 : vector<8x128xf32>
    %34 = vector.broadcast %3 : vector<1x128xf32> to vector<8x128xf32>
    %35 = arith.addf %33, %34 : vector<8x128xf32>
    %cst_17 = arith.constant 0.000000e+00 : f32
    %36 = vector.broadcast %cst_17 : f32 to vector<8x128xf32>
    %37 = arith.maximumf %35, %36 : vector<8x128xf32>
    %c0_18 = arith.constant 0 : index
    %c0_19 = arith.constant 0 : index
    %38 = vector.load %arg4[%c0_18, %c0_19] : memref<128x128xf32, #tpu.memory_space<vmem>>, vector<128x128xf32>
    %cst_20 = arith.constant dense<0.000000e+00> : vector<8x128xf32>
    %39 = tpu.matmul %37, %38, %cst_20 {dimension_numbers = #tpu.dot_dimension_numbers<[1], [0], [0], [1], [0, 0, 1, 1], [], []>} : vector<8x128xf32>, vector<128x128xf32>, vector<8x128xf32> -> vector<8x128xf32>
    %40 = vector.broadcast %4 : vector<1x128xf32> to vector<8x128xf32>
    %41 = arith.addf %39, %40 : vector<8x128xf32>
    %cst_21 = arith.constant dense<0.000000e+00> : vector<8xf32>
    %42 = vector.multi_reduction <add>, %41, %cst_21 [1] : vector<8x128xf32> to vector<8xf32>
    %43 = vector.shape_cast %42 : vector<8xf32> to vector<8x1xf32>
    %cst_22 = arith.constant 3.125000e-02 : f32
    %44 = vector.broadcast %cst_22 : f32 to vector<8x1xf32>
    %45 = arith.mulf %43, %44 : vector<8x1xf32>
    %46 = arith.mulf %41, %41 : vector<8x128xf32>
    %cst_23 = arith.constant dense<0.000000e+00> : vector<8xf32>
    %47 = vector.multi_reduction <add>, %46, %cst_23 [1] : vector<8x128xf32> to vector<8xf32>
    %48 = vector.shape_cast %47 : vector<8xf32> to vector<8x1xf32>
    %cst_24 = arith.constant 3.125000e-02 : f32
    %49 = vector.broadcast %cst_24 : f32 to vector<8x1xf32>
    %50 = arith.mulf %48, %49 : vector<8x1xf32>
    %51 = arith.mulf %45, %45 : vector<8x1xf32>
    %52 = arith.subf %50, %51 : vector<8x1xf32>
    %cst_25 = arith.constant 0.000000e+00 : f32
    %53 = vector.broadcast %cst_25 : f32 to vector<8x1xf32>
    %54 = arith.maximumf %52, %53 : vector<8x1xf32>
    %55 = vector.broadcast %45 : vector<8x1xf32> to vector<8x128xf32>
    %56 = arith.subf %41, %55 : vector<8x128xf32>
    %cst_26 = arith.constant 9.99999974E-6 : f32
    %57 = vector.broadcast %cst_26 : f32 to vector<8x1xf32>
    %58 = arith.addf %54, %57 : vector<8x1xf32>
    %59 = math.rsqrt %58 : vector<8x1xf32>
    %60 = vector.broadcast %59 : vector<8x1xf32> to vector<8x128xf32>
    %61 = arith.mulf %56, %60 : vector<8x128xf32>
    %62 = vector.broadcast %5 : vector<1x128xf32> to vector<8x128xf32>
    %63 = arith.mulf %61, %62 : vector<8x128xf32>
    %64 = vector.broadcast %6 : vector<1x128xf32> to vector<8x128xf32>
    %65 = arith.addf %63, %64 : vector<8x128xf32>
    %cst_27 = arith.constant 0.000000e+00 : f32
    %66 = vector.broadcast %cst_27 : f32 to vector<8x128xf32>
    %67 = arith.maximumf %65, %66 : vector<8x128xf32>
    %c0_28 = arith.constant 0 : index
    %c0_29 = arith.constant 0 : index
    %68 = vector.load %arg5[%c0_28, %c0_29] : memref<128x128xf32, #tpu.memory_space<vmem>>, vector<128x128xf32>
    %cst_30 = arith.constant dense<0.000000e+00> : vector<8x128xf32>
    %69 = tpu.matmul %67, %68, %cst_30 {dimension_numbers = #tpu.dot_dimension_numbers<[1], [0], [0], [1], [0, 0, 1, 1], [], []>} : vector<8x128xf32>, vector<128x128xf32>, vector<8x128xf32> -> vector<8x128xf32>
    %70 = vector.broadcast %7 : vector<1x128xf32> to vector<8x128xf32>
    %71 = arith.addf %69, %70 : vector<8x128xf32>
    %c0_31 = arith.constant 0 : index
    %c0_32 = arith.constant 0 : index
    %72 = vector.load %arg6[%c0_31, %c0_32] : memref<128x128xf32, #tpu.memory_space<vmem>>, vector<128x128xf32>
    %cst_33 = arith.constant dense<0.000000e+00> : vector<8x128xf32>
    %73 = tpu.matmul %71, %72, %cst_33 {dimension_numbers = #tpu.dot_dimension_numbers<[1], [0], [0], [1], [0, 0, 1, 1], [], []>} : vector<8x128xf32>, vector<128x128xf32>, vector<8x128xf32> -> vector<8x128xf32>
    %c14 = arith.constant 14 : index
    %c0_34 = arith.constant 0 : index
    %74 = vector.load %arg2[%c14, %c0_34] : memref<16x128xf32, #tpu.memory_space<vmem>>, vector<1x128xf32>
    %cst_35 = arith.constant 2.000000e+00 : f32
    %75 = vector.broadcast %cst_35 : f32 to vector<8x128xf32>
    %76 = arith.mulf %75, %73 : vector<8x128xf32>
    %77 = vector.broadcast %74 : vector<1x128xf32> to vector<8x128xf32>
    %78 = arith.subf %77, %76 : vector<8x128xf32>
    %cst_36 = arith.constant dense<0x7F800000> : vector<8xf32>
    %79 = vector.multi_reduction <minimumf>, %78, %cst_36 [1] : vector<8x128xf32> to vector<8xf32>
    %80 = vector.shape_cast %79 : vector<8xf32> to vector<8x1xf32>
    %81 = tpu.iota {dimensions = array<i32: 1>} : vector<8x128xi32>
    %82 = vector.broadcast %80 : vector<8x1xf32> to vector<8x128xf32>
    %83 = arith.cmpf oeq, %78, %82 : vector<8x128xf32>
    %c128_i32 = arith.constant 128 : i32
    %84 = vector.broadcast %c128_i32 : i32 to vector<8x128xi32>
    %85 = arith.select %83, %81, %84 : vector<8x128xi1>, vector<8x128xi32>
    %cst_37 = arith.constant dense<2147483647> : vector<8xi32>
    %86 = vector.multi_reduction <minsi>, %85, %cst_37 [1] : vector<8x128xi32> to vector<8xi32>
    %87 = vector.shape_cast %86 : vector<8xi32> to vector<8x1xi32>
    %c0_38 = arith.constant 0 : index
    %c0_39 = arith.constant 0 : index
    %88 = vector.load %arg12[%c0_38, %c0_39] : memref<8x1xi32, #tpu.memory_space<vmem>>, vector<8x1xi32>
    tpu.vector_store %arg12[%c0_38, %c0_39], %87 {strides = array<i32>} : memref<8x1xi32, #tpu.memory_space<vmem>>, vector<8x1xi32>,
    %89 = vector.broadcast %87 : vector<8x1xi32> to vector<8x128xi32>
    %90 = arith.cmpi eq, %81, %89 : vector<8x128xi32>
    %91 = arith.extui %90 : vector<8x128xi1> to vector<8x128xi32>
    %92 = arith.sitofp %91 : vector<8x128xi32> to vector<8x128xf32>
    %c0_40 = arith.constant 0 : index
    %c0_41 = arith.constant 0 : index
    %93 = vector.load %arg7[%c0_40, %c0_41] : memref<128x128xf32, #tpu.memory_space<vmem>>, vector<128x128xf32>
    %cst_42 = arith.constant dense<0.000000e+00> : vector<8x128xf32>
    %94 = tpu.matmul %92, %93, %cst_42 {dimension_numbers = #tpu.dot_dimension_numbers<[1], [0], [0], [1], [0, 0, 1, 1], [], []>} : vector<8x128xf32>, vector<128x128xf32>, vector<8x128xf32> -> vector<8x128xf32>
    %c7 = arith.constant 7 : index
    %c0_43 = arith.constant 0 : index
    %95 = vector.load %arg2[%c7, %c0_43] : memref<16x128xf32, #tpu.memory_space<vmem>>, vector<1x128xf32>
    %c8 = arith.constant 8 : index
    %c0_44 = arith.constant 0 : index
    %96 = vector.load %arg2[%c8, %c0_44] : memref<16x128xf32, #tpu.memory_space<vmem>>, vector<1x128xf32>
    %c9 = arith.constant 9 : index
    %c0_45 = arith.constant 0 : index
    %97 = vector.load %arg2[%c9, %c0_45] : memref<16x128xf32, #tpu.memory_space<vmem>>, vector<1x128xf32>
    %c10 = arith.constant 10 : index
    %c0_46 = arith.constant 0 : index
    %98 = vector.load %arg2[%c10, %c0_46] : memref<16x128xf32, #tpu.memory_space<vmem>>, vector<1x128xf32>
    %c11 = arith.constant 11 : index
    %c0_47 = arith.constant 0 : index
    %99 = vector.load %arg2[%c11, %c0_47] : memref<16x128xf32, #tpu.memory_space<vmem>>, vector<1x128xf32>
    %c12 = arith.constant 12 : index
    %c0_48 = arith.constant 0 : index
    %100 = vector.load %arg2[%c12, %c0_48] : memref<16x128xf32, #tpu.memory_space<vmem>>, vector<1x128xf32>
    %c13 = arith.constant 13 : index
    %c0_49 = arith.constant 0 : index
    %101 = vector.load %arg2[%c13, %c0_49] : memref<16x128xf32, #tpu.memory_space<vmem>>, vector<1x128xf32>
    %c0_50 = arith.constant 0 : index
    %c0_51 = arith.constant 0 : index
    %102 = vector.load %arg8[%c0_50, %c0_51] : memref<128x128xf32, #tpu.memory_space<vmem>>, vector<128x128xf32>
    %cst_52 = arith.constant dense<0.000000e+00> : vector<8x128xf32>
    %103 = tpu.matmul %94, %102, %cst_52 {dimension_numbers = #tpu.dot_dimension_numbers<[1], [0], [0], [1], [0, 0, 1, 1], [], []>} : vector<8x128xf32>, vector<128x128xf32>, vector<8x128xf32> -> vector<8x128xf32>
    %104 = vector.broadcast %95 : vector<1x128xf32> to vector<8x128xf32>
    %105 = arith.addf %103, %104 : vector<8x128xf32>
    %cst_53 = arith.constant dense<0.000000e+00> : vector<8xf32>
    %106 = vector.multi_reduction <add>, %105, %cst_53 [1] : vector<8x128xf32> to vector<8xf32>
    %107 = vector.shape_cast %106 : vector<8xf32> to vector<8x1xf32>
    %cst_54 = arith.constant 3.125000e-02 : f32
    %108 = vector.broadcast %cst_54 : f32 to vector<8x1xf32>
    %109 = arith.mulf %107, %108 : vector<8x1xf32>
    %110 = arith.mulf %105, %105 : vector<8x128xf32>
    %cst_55 = arith.constant dense<0.000000e+00> : vector<8xf32>
    %111 = vector.multi_reduction <add>, %110, %cst_55 [1] : vector<8x128xf32> to vector<8xf32>
    %112 = vector.shape_cast %111 : vector<8xf32> to vector<8x1xf32>
    %cst_56 = arith.constant 3.125000e-02 : f32
    %113 = vector.broadcast %cst_56 : f32 to vector<8x1xf32>
    %114 = arith.mulf %112, %113 : vector<8x1xf32>
    %115 = arith.mulf %109, %109 : vector<8x1xf32>
    %116 = arith.subf %114, %115 : vector<8x1xf32>
    %cst_57 = arith.constant 0.000000e+00 : f32
    %117 = vector.broadcast %cst_57 : f32 to vector<8x1xf32>
    %118 = arith.maximumf %116, %117 : vector<8x1xf32>
    %119 = vector.broadcast %109 : vector<8x1xf32> to vector<8x128xf32>
    %120 = arith.subf %105, %119 : vector<8x128xf32>
    %cst_58 = arith.constant 9.99999974E-6 : f32
    %121 = vector.broadcast %cst_58 : f32 to vector<8x1xf32>
    %122 = arith.addf %118, %121 : vector<8x1xf32>
    %123 = math.rsqrt %122 : vector<8x1xf32>
    %124 = vector.broadcast %123 : vector<8x1xf32> to vector<8x128xf32>
    %125 = arith.mulf %120, %124 : vector<8x128xf32>
    %126 = vector.broadcast %96 : vector<1x128xf32> to vector<8x128xf32>
    %127 = arith.mulf %125, %126 : vector<8x128xf32>
    %128 = vector.broadcast %97 : vector<1x128xf32> to vector<8x128xf32>
    %129 = arith.addf %127, %128 : vector<8x128xf32>
    %cst_59 = arith.constant 0.000000e+00 : f32
    %130 = vector.broadcast %cst_59 : f32 to vector<8x128xf32>
    %131 = arith.maximumf %129, %130 : vector<8x128xf32>
    %c0_60 = arith.constant 0 : index
    %c0_61 = arith.constant 0 : index
    %132 = vector.load %arg9[%c0_60, %c0_61] : memref<128x128xf32, #tpu.memory_space<vmem>>, vector<128x128xf32>
    %cst_62 = arith.constant dense<0.000000e+00> : vector<8x128xf32>
    %133 = tpu.matmul %131, %132, %cst_62 {dimension_numbers = #tpu.dot_dimension_numbers<[1], [0], [0], [1], [0, 0, 1, 1], [], []>} : vector<8x128xf32>, vector<128x128xf32>, vector<8x128xf32> -> vector<8x128xf32>
    %134 = vector.broadcast %98 : vector<1x128xf32> to vector<8x128xf32>
    %135 = arith.addf %133, %134 : vector<8x128xf32>
    %cst_63 = arith.constant dense<0.000000e+00> : vector<8xf32>
    %136 = vector.multi_reduction <add>, %135, %cst_63 [1] : vector<8x128xf32> to vector<8xf32>
    %137 = vector.shape_cast %136 : vector<8xf32> to vector<8x1xf32>
    %cst_64 = arith.constant 3.125000e-02 : f32
    %138 = vector.broadcast %cst_64 : f32 to vector<8x1xf32>
    %139 = arith.mulf %137, %138 : vector<8x1xf32>
    %140 = arith.mulf %135, %135 : vector<8x128xf32>
    %cst_65 = arith.constant dense<0.000000e+00> : vector<8xf32>
    %141 = vector.multi_reduction <add>, %140, %cst_65 [1] : vector<8x128xf32> to vector<8xf32>
    %142 = vector.shape_cast %141 : vector<8xf32> to vector<8x1xf32>
    %cst_66 = arith.constant 3.125000e-02 : f32
    %143 = vector.broadcast %cst_66 : f32 to vector<8x1xf32>
    %144 = arith.mulf %142, %143 : vector<8x1xf32>
    %145 = arith.mulf %139, %139 : vector<8x1xf32>
    %146 = arith.subf %144, %145 : vector<8x1xf32>
    %cst_67 = arith.constant 0.000000e+00 : f32
    %147 = vector.broadcast %cst_67 : f32 to vector<8x1xf32>
    %148 = arith.maximumf %146, %147 : vector<8x1xf32>
    %149 = vector.broadcast %139 : vector<8x1xf32> to vector<8x128xf32>
    %150 = arith.subf %135, %149 : vector<8x128xf32>
    %cst_68 = arith.constant 9.99999974E-6 : f32
    %151 = vector.broadcast %cst_68 : f32 to vector<8x1xf32>
    %152 = arith.addf %148, %151 : vector<8x1xf32>
    %153 = math.rsqrt %152 : vector<8x1xf32>
    %154 = vector.broadcast %153 : vector<8x1xf32> to vector<8x128xf32>
    %155 = arith.mulf %150, %154 : vector<8x128xf32>
    %156 = vector.broadcast %99 : vector<1x128xf32> to vector<8x128xf32>
    %157 = arith.mulf %155, %156 : vector<8x128xf32>
    %158 = vector.broadcast %100 : vector<1x128xf32> to vector<8x128xf32>
    %159 = arith.addf %157, %158 : vector<8x128xf32>
    %cst_69 = arith.constant 0.000000e+00 : f32
    %160 = vector.broadcast %cst_69 : f32 to vector<8x128xf32>
    %161 = arith.maximumf %159, %160 : vector<8x128xf32>
    %c0_70 = arith.constant 0 : index
    %c0_71 = arith.constant 0 : index
    %162 = vector.load %arg10[%c0_70, %c0_71] : memref<128x128xf32, #tpu.memory_space<vmem>>, vector<128x128xf32>
    %cst_72 = arith.constant dense<0.000000e+00> : vector<8x128xf32>
    %163 = tpu.matmul %161, %162, %cst_72 {dimension_numbers = #tpu.dot_dimension_numbers<[1], [0], [0], [1], [0, 0, 1, 1], [], []>} : vector<8x128xf32>, vector<128x128xf32>, vector<8x128xf32> -> vector<8x128xf32>
    %164 = vector.broadcast %101 : vector<1x128xf32> to vector<8x128xf32>
    %165 = arith.addf %163, %164 : vector<8x128xf32>
    %c0_73 = arith.constant 0 : index
    %c0_74 = arith.constant 0 : index
    %166 = vector.load %arg11[%c0_73, %c0_74] : memref<8x128xf32, #tpu.memory_space<vmem>>, vector<8x128xf32>
    tpu.vector_store %arg11[%c0_73, %c0_74], %165 {strides = array<i32>} : memref<8x128xf32, #tpu.memory_space<vmem>>, vector<8x128xf32>,
    %c8_i32 = arith.constant 8 : i32
    %167 = arith.muli %arg0, %c8_i32 : i32
    %168 = tpu.iota {dimensions = array<i32: 0>} : vector<8x1xi32>
    %169 = vector.broadcast %167 : i32 to vector<8x1xi32>
    %170 = arith.addi %169, %168 : vector<8x1xi32>
    %c8_i32_75 = arith.constant 8 : i32
    %171 = vector.broadcast %c8_i32_75 : i32 to vector<8x1xi32>
    %172 = arith.cmpi slt, %170, %171 : vector<8x1xi32>
    %173 = arith.extui %172 : vector<8x1xi1> to vector<8x1xi32>
    %174 = arith.sitofp %173 : vector<8x1xi32> to vector<8x1xf32>
    %175 = arith.subf %165, %0 : vector<8x128xf32>
    %176 = arith.subf %71, %94 : vector<8x128xf32>
    %177 = arith.mulf %175, %175 : vector<8x128xf32>
    %cst_76 = arith.constant dense<0.000000e+00> : vector<8xf32>
    %178 = vector.multi_reduction <add>, %177, %cst_76 [1] : vector<8x128xf32> to vector<8xf32>
    %179 = vector.shape_cast %178 : vector<8xf32> to vector<8x1xf32>
    %180 = arith.mulf %179, %174 : vector<8x1xf32>
    %181 = vector.shape_cast %180 : vector<8x1xf32> to vector<1x8x1xf32>
    %cst_77 = arith.constant dense<0.000000e+00> : vector<1xf32>
    %182 = vector.multi_reduction <add>, %181, %cst_77 [1, 2] : vector<1x8x1xf32> to vector<1xf32>
    %183 = vector.shape_cast %182 : vector<1xf32> to vector<1x1x1xf32>
    %184 = vector.extract %183[0, 0, 0] : f32 from vector<1x1x1xf32>
    %185 = arith.mulf %176, %176 : vector<8x128xf32>
    %cst_78 = arith.constant dense<0.000000e+00> : vector<8xf32>
    %186 = vector.multi_reduction <add>, %185, %cst_78 [1] : vector<8x128xf32> to vector<8xf32>
    %187 = vector.shape_cast %186 : vector<8xf32> to vector<8x1xf32>
    %188 = arith.mulf %187, %174 : vector<8x1xf32>
    %189 = vector.shape_cast %188 : vector<8x1xf32> to vector<1x8x1xf32>
    %cst_79 = arith.constant dense<0.000000e+00> : vector<1xf32>
    %190 = vector.multi_reduction <add>, %189, %cst_79 [1, 2] : vector<1x8x1xf32> to vector<1xf32>
    %191 = vector.shape_cast %190 : vector<1xf32> to vector<1x1x1xf32>
    %192 = vector.extract %191[0, 0, 0] : f32 from vector<1x1x1xf32>
    %193 = tpu.iota {dimensions = array<i32: 2>} : vector<1x8x128xi32>
    %c0_i32 = arith.constant 0 : i32
    %194 = vector.broadcast %c0_i32 : i32 to vector<1x8x128xi32>
    %195 = arith.cmpi eq, %193, %194 : vector<1x8x128xi32>
    %c1_i32 = arith.constant 1 : i32
    %196 = vector.broadcast %c1_i32 : i32 to vector<1x8x128xi32>
    %197 = arith.cmpi eq, %193, %196 : vector<1x8x128xi32>
    %cst_80 = arith.constant 0.000000e+00 : f32
    %198 = vector.broadcast %192 : f32 to vector<1x8x128xf32>
    %199 = vector.broadcast %cst_80 : f32 to vector<1x8x128xf32>
    %200 = arith.select %197, %198, %199 : vector<1x8x128xi1>, vector<1x8x128xf32>
    %201 = vector.broadcast %184 : f32 to vector<1x8x128xf32>
    %202 = arith.select %195, %201, %200 : vector<1x8x128xi1>, vector<1x8x128xf32>
    %c0_81 = arith.constant 0 : index
    %c0_82 = arith.constant 0 : index
    %c0_83 = arith.constant 0 : index
    %203 = vector.load %arg13[%c0_81, %c0_82, %c0_83] : memref<1x8x128xf32, #tpu.memory_space<vmem>>, vector<1x8x128xf32>
    tpu.vector_store %arg13[%c0_81, %c0_82, %c0_83], %202 {strides = array<i32>} : memref<1x8x128xf32, #tpu.memory_space<vmem>>, vector<1x8x128xf32>,
    return
  }
  func.func @transform_0(%arg0: i32) -> (i32, i32) {
    %c0_i32 = arith.constant 0 : i32
    %c0_i32_0 = arith.constant 0 : i32
    return %arg0, %c0_i32 : i32, i32
  }
  func.func @transform_1(%arg0: i32) -> (i32, i32) {
    %c0_i32 = arith.constant 0 : i32
    %c0_i32_0 = arith.constant 0 : i32
    %c0_i32_1 = arith.constant 0 : i32
    return %c0_i32, %c0_i32_0 : i32, i32
  }
  func.func @transform_2(%arg0: i32) -> (i32, i32) {
    %c0_i32 = arith.constant 0 : i32
    %c0_i32_0 = arith.constant 0 : i32
    %c0_i32_1 = arith.constant 0 : i32
    return %c0_i32, %c0_i32_0 : i32, i32
  }
  func.func @transform_3(%arg0: i32) -> (i32, i32) {
    %c0_i32 = arith.constant 0 : i32
    %c0_i32_0 = arith.constant 0 : i32
    %c0_i32_1 = arith.constant 0 : i32
    return %c0_i32, %c0_i32_0 : i32, i32
  }
  func.func @transform_4(%arg0: i32) -> (i32, i32) {
    %c0_i32 = arith.constant 0 : i32
    %c0_i32_0 = arith.constant 0 : i32
    %c0_i32_1 = arith.constant 0 : i32
    return %c0_i32, %c0_i32_0 : i32, i32
  }
  func.func @transform_5(%arg0: i32) -> (i32, i32) {
    %c0_i32 = arith.constant 0 : i32
    %c0_i32_0 = arith.constant 0 : i32
    %c0_i32_1 = arith.constant 0 : i32
    return %c0_i32, %c0_i32_0 : i32, i32
  }
  func.func @transform_6(%arg0: i32) -> (i32, i32) {
    %c0_i32 = arith.constant 0 : i32
    %c0_i32_0 = arith.constant 0 : i32
    %c0_i32_1 = arith.constant 0 : i32
    return %c0_i32, %c0_i32_0 : i32, i32
  }
  func.func @transform_7(%arg0: i32) -> (i32, i32) {
    %c0_i32 = arith.constant 0 : i32
    %c0_i32_0 = arith.constant 0 : i32
    %c0_i32_1 = arith.constant 0 : i32
    return %c0_i32, %c0_i32_0 : i32, i32
  }
  func.func @transform_8(%arg0: i32) -> (i32, i32) {
    %c0_i32 = arith.constant 0 : i32
    %c0_i32_0 = arith.constant 0 : i32
    %c0_i32_1 = arith.constant 0 : i32
    return %c0_i32, %c0_i32_0 : i32, i32
  }
  func.func @transform_9(%arg0: i32) -> (i32, i32) {
    %c0_i32 = arith.constant 0 : i32
    %c0_i32_0 = arith.constant 0 : i32
    %c0_i32_1 = arith.constant 0 : i32
    return %c0_i32, %c0_i32_0 : i32, i32
  }
  func.func @transform_10(%arg0: i32) -> (i32, i32) {
    %c0_i32 = arith.constant 0 : i32
    %c0_i32_0 = arith.constant 0 : i32
    return %arg0, %c0_i32 : i32, i32
  }
  func.func @transform_11(%arg0: i32) -> (i32, i32) {
    %c0_i32 = arith.constant 0 : i32
    %c0_i32_0 = arith.constant 0 : i32
    return %arg0, %c0_i32 : i32, i32
  }
  func.func @transform_12(%arg0: i32) -> (i32, i32, i32) {
    %c0_i32 = arith.constant 0 : i32
    %c0_i32_0 = arith.constant 0 : i32
    %c0_i32_1 = arith.constant 0 : i32
    return %arg0, %c0_i32, %c0_i32_0 : i32, i32, i32
  }
}

</mosaic_0001>

<llo_original>
// kernel: vqvae_forward.1
$region0: #{vqvae_forward.1}
  #allocation0 [shape = 'u32[]', space=smem, size = 0x4, offset = 0x4, fixed_abs, tag = 'smem constant byte address 0x4 - core index']
  #allocation1 [shape = 'u32[72,128]{1,0:T(1,128)}', space=vmem, size = 0x9000, scoped, tag = 'internal scratch']
  %s0 = inlined_call_operand.vmem [shape: f32[8,128], index: 0, kind: input, shape index: {}]
  %s1 = inlined_call_operand.vmem [shape: f32[16,128], index: 1, kind: input, shape index: {}]
  %s2 = inlined_call_operand.vmem [shape: f32[128,128], index: 2, kind: input, shape index: {}]
  %s3 = inlined_call_operand.vmem [shape: f32[128,128], index: 3, kind: input, shape index: {}]
  %s4 = inlined_call_operand.vmem [shape: f32[128,128], index: 4, kind: input, shape index: {}]
  %s5 = inlined_call_operand.vmem [shape: f32[128,128], index: 5, kind: input, shape index: {}]
  %s6 = inlined_call_operand.vmem [shape: f32[128,128], index: 6, kind: input, shape index: {}]
  %s7 = inlined_call_operand.vmem [shape: f32[128,128], index: 7, kind: input, shape index: {}]
  %s8 = inlined_call_operand.vmem [shape: f32[128,128], index: 8, kind: input, shape index: {}]
  %s9 = inlined_call_operand.vmem [shape: f32[128,128], index: 9, kind: input, shape index: {}]
  %s10 = inlined_call_operand.hbm [shape: f32[8,128], index: 10, kind: output, shape index: {0}]
  %s11 = inlined_call_operand.vmem [shape: s32[8,1], index: 11, kind: output, shape index: {1}]
  %s12 = inlined_call_operand.vmem [shape: f32[1,8,128], index: 12, kind: output, shape index: {2}]
  %13 = xla_tuple %s10, %s11, %s12
  %s14 = sld [smem:[#allocation0]]
  $region66: #{vqvae_forward.1} parent=0
    _
  %s16 = ssub.s32 1, %s14
  %s17 = scalar_select 0, %s16, %s14
  $region1: #{vqvae_forward.1} parent=0
    #allocation2 [shape = 'u8[4096]{0}', space=vmem, size = 0x1000, scoped, tag = 'output window, operand 0, single buffered']
    #allocation3 [shape = 's32[1]{0}', space=sflag, size = 0x4, scoped, tag = 'scoped memory for vqvae_forward.1']
    %18 = vsyncpa [#allocation3], 0
    // Predicated region
    $region2: #{vqvae_forward.1} parent=1 // pred_check
      _
    $region3: #{vqvae_forward.1} parent=1 // pred_check_branch
      %20 = sbr.rel (0) target = $region5
    $region4: #{vqvae_forward.1} parent=1 // pred_region
      _
    $region5: #{vqvae_forward.1} parent=1 // pred_fallthru
      _
    // Predicated region
    $region6: #{vqvae_forward.1} parent=1 // pred_check
      _
    $region7: #{vqvae_forward.1} parent=1 // pred_check_branch
      %22 = sbr.rel (0) target = $region9
    $region8: #{vqvae_forward.1} parent=1 // pred_region
      _
    $region9: #{vqvae_forward.1} parent=1 // pred_fallthru
      _
    // Predicated region
    $region10: #{vqvae_forward.1} parent=1 // pred_check
      _
    $region11: #{vqvae_forward.1} parent=1 // pred_check_branch
      %24 = sbr.rel (0) target = $region13
    $region12: #{vqvae_forward.1} parent=1 // pred_region
      _
    $region13: #{vqvae_forward.1} parent=1 // pred_fallthru
      _
    // Predicated region
    $region14: #{vqvae_forward.1} parent=1 // pred_check
      _
    $region15: #{vqvae_forward.1} parent=1 // pred_check_branch
      %26 = sbr.rel (0) target = $region17
    $region16: #{vqvae_forward.1} parent=1 // pred_region
      _
    $region17: #{vqvae_forward.1} parent=1 // pred_fallthru
      _
    // Predicated region
    $region18: #{vqvae_forward.1} parent=1 // pred_check
      _
    $region19: #{vqvae_forward.1} parent=1 // pred_check_branch
      %28 = sbr.rel (0) target = $region21
    $region20: #{vqvae_forward.1} parent=1 // pred_region
      _
    $region21: #{vqvae_forward.1} parent=1 // pred_fallthru
      _
    // Predicated region
    $region22: #{vqvae_forward.1} parent=1 // pred_check
      _
    $region23: #{vqvae_forward.1} parent=1 // pred_check_branch
      %30 = sbr.rel (0) target = $region25
    $region24: #{vqvae_forward.1} parent=1 // pred_region
      _
    $region25: #{vqvae_forward.1} parent=1 // pred_fallthru
      _
    // Predicated region
    $region26: #{vqvae_forward.1} parent=1 // pred_check
      _
    $region27: #{vqvae_forward.1} parent=1 // pred_check_branch
      %32 = sbr.rel (0) target = $region29
    $region28: #{vqvae_forward.1} parent=1 // pred_region
      _
    $region29: #{vqvae_forward.1} parent=1 // pred_fallthru
      _
    // Predicated region
    $region30: #{vqvae_forward.1} parent=1 // pred_check
      _
    $region31: #{vqvae_forward.1} parent=1 // pred_check_branch
      %34 = sbr.rel (0) target = $region33
    $region32: #{vqvae_forward.1} parent=1 // pred_region
      _
    $region33: #{vqvae_forward.1} parent=1 // pred_fallthru
      _
    // Predicated region
    $region34: #{vqvae_forward.1} parent=1 // pred_check
      _
    $region35: #{vqvae_forward.1} parent=1 // pred_check_branch
      %36 = sbr.rel (0) target = $region37
    $region36: #{vqvae_forward.1} parent=1 // pred_region
      _
    $region37: #{vqvae_forward.1} parent=1 // pred_fallthru
      _
    // Predicated region
    $region38: #{vqvae_forward.1} parent=1 // pred_check
      _
    $region39: #{vqvae_forward.1} parent=1 // pred_check_branch
      %38 = sbr.rel (0) target = $region41
    $region40: #{vqvae_forward.1} parent=1 // pred_region
      _
    $region41: #{vqvae_forward.1} parent=1 // pred_fallthru
      _
    %v39 = vld [vmem:[%s0] sm:$0xff]
    %v40 = vld [vmem:[%s1] sm:$0x1]
    %v41 = vld [vmem:[%s1 + $0x1] sm:$0x1]
    %v42 = vld [vmem:[%s1 + $0x2] sm:$0x1]
    %v43 = vld [vmem:[%s1 + $0x3] sm:$0x1]
    %v44 = vld [vmem:[%s1 + $0x4] sm:$0x1]
    %v45 = vld [vmem:[%s1 + $0x5] sm:$0x1]
    %v46 = vld [vmem:[%s1 + $0x6] sm:$0x1]
    %v47 = vld [vmem:[%s2] sm:$0xff]
    %v48 = vld [vmem:[%s2 + $0x8] sm:$0xff]
    %v49 = vld [vmem:[%s2 + $0x10] sm:$0xff]
    %v50 = vld [vmem:[%s2 + $0x18] sm:$0xff]
    %v51 = vld [vmem:[%s2 + $0x20] sm:$0xff]
    %v52 = vld [vmem:[%s2 + $0x28] sm:$0xff]
    %v53 = vld [vmem:[%s2 + $0x30] sm:$0xff]
    %v54 = vld [vmem:[%s2 + $0x38] sm:$0xff]
    %v55 = vld [vmem:[%s2 + $0x40] sm:$0xff]
    %v56 = vld [vmem:[%s2 + $0x48] sm:$0xff]
    %v57 = vld [vmem:[%s2 + $0x50] sm:$0xff]
    %v58 = vld [vmem:[%s2 + $0x58] sm:$0xff]
    %v59 = vld [vmem:[%s2 + $0x60] sm:$0xff]
    %v60 = vld [vmem:[%s2 + $0x68] sm:$0xff]
    %v61 = vld [vmem:[%s2 + $0x70] sm:$0xff]
    %v62 = vld [vmem:[%s2 + $0x78] sm:$0xff]
    %v63 = vperm.slane %v40, 0
    %64 = vmatpush.msra.mxu0 %v62
    %65 = vmatpush.msra.mxu0 %v61
    %66 = vmatpush.msra.mxu0 %v60
    %67 = vmatpush.msra.mxu0 %v59
    %68 = vmatpush.msra.mxu0 %v58
    %69 = vmatpush.msra.mxu0 %v57
    %70 = vmatpush.msra.mxu0 %v56
    %71 = vmatpush.msra.mxu0 %v55
    %72 = vmatpush.msra.mxu0 %v54
    %73 = vmatpush.msra.mxu0 %v53
    %74 = vmatpush.msra.mxu0 %v52
    %75 = vmatpush.msra.mxu0 %v51
    %76 = vmatpush.msra.mxu0 %v50
    %77 = vmatpush.msra.mxu0 %v49
    %78 = vmatpush.msra.mxu0 %v48
    %79 = vmatpush.msra.mxu0 %v47
    %80 = vmatmul.f32.gmra.mxu0 %v39
    %v81 = vpop.f32.mrf.mxu0
    %v82 = vadd.f32 %v63, %v81
    %83 = vdwg.mxu0
    %84 = vadd.xlane.f32.xlu0 %v82
    %v85 = vpop.xlane.xlu0 %84
    %v86 = vmul.f32 %v85, 0.03125
    %v87 = vmul.f32 %v82, %v82
    %88 = vadd.xlane.f32.xlu0 %v87
    %v89 = vpop.xlane.xlu0 %88
    %v90 = vmul.f32 %v89, 0.03125
    %v91 = vmul.f32 %v86, %v86
    %v92 = vsub.f32 %v90, %v91
    %v93 = vmax.f32 %v92, 0.0
    %v94 = vsub.f32 %v82, %v86
    %v95 = vadd.f32 %v93, 1e-05
    %v96 = vrsqrt.pop %v95
    %v97 = vmul.f32 %v96, %v95
    %v98 = vmul.f32 %v97, %v96
    %v99 = vmul.f32 0.5, %v98
    %v100 = vsub.f32 1.5, %v99
    %v101 = vmul.f32 %v96, %v100
    %vm102 = vweird.f32 %v95
    %vm103 = vweird.f32 %v96
    %vm104 = vmor %vm102, %vm103
    %v105 = vsel %vm104, %v96, %v101
    %v106 = vmul.f32 %v94, %v105
    %v107 = vperm.slane %v41, 0
    %v108 = vmul.f32 %v106, %v107
    %v109 = vperm.slane %v42, 0
    %v110 = vadd.f32 %v108, %v109
    %v111 = vmax.f32 %v110, 0.0
    %v112 = vld [vmem:[%s3] sm:$0xff]
    %v113 = vld [vmem:[%s3 + $0x8] sm:$0xff]
    %v114 = vld [vmem:[%s3 + $0x10] sm:$0xff]
    %v115 = vld [vmem:[%s3 + $0x18] sm:$0xff]
    %v116 = vld [vmem:[%s3 + $0x20] sm:$0xff]
    %v117 = vld [vmem:[%s3 + $0x28] sm:$0xff]
    %v118 = vld [vmem:[%s3 + $0x30] sm:$0xff]
    %v119 = vld [vmem:[%s3 + $0x38] sm:$0xff]
    %v120 = vld [vmem:[%s3 + $0x40] sm:$0xff]
    %v121 = vld [vmem:[%s3 + $0x48] sm:$0xff]
    %v122 = vld [vmem:[%s3 + $0x50] sm:$0xff]
    %v123 = vld [vmem:[%s3 + $0x58] sm:$0xff]
    %v124 = vld [vmem:[%s3 + $0x60] sm:$0xff]
    %v125 = vld [vmem:[%s3 + $0x68] sm:$0xff]
    %v126 = vld [vmem:[%s3 + $0x70] sm:$0xff]
    %v127 = vld [vmem:[%s3 + $0x78] sm:$0xff]
    %v128 = vperm.slane %v43, 0
    %129 = vmatpush.msra.mxu0 %v127
    %130 = vmatpush.msra.mxu0 %v126
    %131 = vmatpush.msra.mxu0 %v125
    %132 = vmatpush.msra.mxu0 %v124
    %133 = vmatpush.msra.mxu0 %v123
    %134 = vmatpush.msra.mxu0 %v122
    %135 = vmatpush.msra.mxu0 %v121
    %136 = vmatpush.msra.mxu0 %v120
    %137 = vmatpush.msra.mxu0 %v119
    %138 = vmatpush.msra.mxu0 %v118
    %139 = vmatpush.msra.mxu0 %v117
    %140 = vmatpush.msra.mxu0 %v116
    %141 = vmatpush.msra.mxu0 %v115
    %142 = vmatpush.msra.mxu0 %v114
    %143 = vmatpush.msra.mxu0 %v113
    %144 = vmatpush.msra.mxu0 %v112
    %145 = vmatmul.f32.gmra.mxu0 %v111
    %v146 = vpop.f32.mrf.mxu0
    %v147 = vadd.f32 %v128, %v146
    %148 = vdwg.mxu0
    %149 = vadd.xlane.f32.xlu0 %v147
    %v150 = vpop.xlane.xlu0 %149
    %v151 = vmul.f32 %v150, 0.03125
    %v152 = vmul.f32 %v147, %v147
    %153 = vadd.xlane.f32.xlu0 %v152
    %v154 = vpop.xlane.xlu0 %153
    %v155 = vmul.f32 %v154, 0.03125
    %v156 = vmul.f32 %v151, %v151
    %v157 = vsub.f32 %v155, %v156
    %v158 = vmax.f32 %v157, 0.0
    %v159 = vsub.f32 %v147, %v151
    %v160 = vadd.f32 %v158, 1e-05
    %v161 = vrsqrt.pop %v160
    %v162 = vmul.f32 %v161, %v160
    %v163 = vmul.f32 %v162, %v161
    %v164 = vmul.f32 0.5, %v163
    %v165 = vsub.f32 1.5, %v164
    %v166 = vmul.f32 %v161, %v165
    %vm167 = vweird.f32 %v160
    %vm168 = vweird.f32 %v161
    %vm169 = vmor %vm167, %vm168
    %v170 = vsel %vm169, %v161, %v166
    %v171 = vmul.f32 %v159, %v170
    %v172 = vperm.slane %v44, 0
    %v173 = vmul.f32 %v171, %v172
    %v174 = vperm.slane %v45, 0
    %v175 = vadd.f32 %v173, %v174
    %v176 = vmax.f32 %v175, 0.0
    %v177 = vld [vmem:[%s4] sm:$0xff]
    %v178 = vld [vmem:[%s4 + $0x8] sm:$0xff]
    %v179 = vld [vmem:[%s4 + $0x10] sm:$0xff]
    %v180 = vld [vmem:[%s4 + $0x18] sm:$0xff]
    %v181 = vld [vmem:[%s4 + $0x20] sm:$0xff]
    %v182 = vld [vmem:[%s4 + $0x28] sm:$0xff]
    %v183 = vld [vmem:[%s4 + $0x30] sm:$0xff]
    %v184 = vld [vmem:[%s4 + $0x38] sm:$0xff]
    %v185 = vld [vmem:[%s4 + $0x40] sm:$0xff]
    %v186 = vld [vmem:[%s4 + $0x48] sm:$0xff]
    %v187 = vld [vmem:[%s4 + $0x50] sm:$0xff]
    %v188 = vld [vmem:[%s4 + $0x58] sm:$0xff]
    %v189 = vld [vmem:[%s4 + $0x60] sm:$0xff]
    %v190 = vld [vmem:[%s4 + $0x68] sm:$0xff]
    %v191 = vld [vmem:[%s4 + $0x70] sm:$0xff]
    %v192 = vld [vmem:[%s4 + $0x78] sm:$0xff]
    %v193 = vperm.slane %v46, 0
    %194 = vmatpush.msra.mxu0 %v192
    %195 = vmatpush.msra.mxu0 %v191
    %196 = vmatpush.msra.mxu0 %v190
    %197 = vmatpush.msra.mxu0 %v189
    %198 = vmatpush.msra.mxu0 %v188
    %199 = vmatpush.msra.mxu0 %v187
    %200 = vmatpush.msra.mxu0 %v186
    %201 = vmatpush.msra.mxu0 %v185
    %202 = vmatpush.msra.mxu0 %v184
    %203 = vmatpush.msra.mxu0 %v183
    %204 = vmatpush.msra.mxu0 %v182
    %205 = vmatpush.msra.mxu0 %v181
    %206 = vmatpush.msra.mxu0 %v180
    %207 = vmatpush.msra.mxu0 %v179
    %208 = vmatpush.msra.mxu0 %v178
    %209 = vmatpush.msra.mxu0 %v177
    %210 = vmatmul.f32.gmra.mxu0 %v176
    %v211 = vpop.f32.mrf.mxu0
    %v212 = vadd.f32 %v193, %v211
    %213 = vdwg.mxu0
    %v214 = vld [vmem:[%s5] sm:$0xff]
    %v215 = vld [vmem:[%s5 + $0x8] sm:$0xff]
    %v216 = vld [vmem:[%s5 + $0x10] sm:$0xff]
    %v217 = vld [vmem:[%s5 + $0x18] sm:$0xff]
    %v218 = vld [vmem:[%s5 + $0x20] sm:$0xff]
    %v219 = vld [vmem:[%s5 + $0x28] sm:$0xff]
    %v220 = vld [vmem:[%s5 + $0x30] sm:$0xff]
    %v221 = vld [vmem:[%s5 + $0x38] sm:$0xff]
    %v222 = vld [vmem:[%s5 + $0x40] sm:$0xff]
    %v223 = vld [vmem:[%s5 + $0x48] sm:$0xff]
    %v224 = vld [vmem:[%s5 + $0x50] sm:$0xff]
    %v225 = vld [vmem:[%s5 + $0x58] sm:$0xff]
    %v226 = vld [vmem:[%s5 + $0x60] sm:$0xff]
    %v227 = vld [vmem:[%s5 + $0x68] sm:$0xff]
    %v228 = vld [vmem:[%s5 + $0x70] sm:$0xff]
    %v229 = vld [vmem:[%s5 + $0x78] sm:$0xff]
    %230 = vmatpush.msra.mxu0 %v229
    %231 = vmatpush.msra.mxu0 %v228
    %232 = vmatpush.msra.mxu0 %v227
    %233 = vmatpush.msra.mxu0 %v226
    %234 = vmatpush.msra.mxu0 %v225
    %235 = vmatpush.msra.mxu0 %v224
    %236 = vmatpush.msra.mxu0 %v223
    %237 = vmatpush.msra.mxu0 %v222
    %238 = vmatpush.msra.mxu0 %v221
    %239 = vmatpush.msra.mxu0 %v220
    %240 = vmatpush.msra.mxu0 %v219
    %241 = vmatpush.msra.mxu0 %v218
    %242 = vmatpush.msra.mxu0 %v217
    %243 = vmatpush.msra.mxu0 %v216
    %244 = vmatpush.msra.mxu0 %v215
    %245 = vmatpush.msra.mxu0 %v214
    %246 = vmatmul.f32.gmra.mxu0 %v212
    %v247 = vpop.f32.mrf.mxu0
    %v248 = vadd.f32 0.0, %v247
    %249 = vdwg.mxu0
    %v250 = vld [vmem:[%s1 + $0xe] sm:$0x1]
    %v251 = vmul.f32 %v248, 2.0
    %v252 = vperm.slane %v250, 0
    %v253 = vsub.f32 %v252, %v251
    %254 = vmin.xlane.f32.xlu0 %v253
    %v255 = vpop.xlane.xlu0 %254
    %v256 = vlaneseq
    %v257 = vand.u32 %v256, 127
    %vm258 = vcmp.eq.f32.partialorder %v253, %v255
    %v259 = vsel %vm258, %v257, 128
    %v260 = vand.u32 %v259, 65535
    %v261 = vshra.s32 %v259, 16
    %v262 = vcvt.s32.f32 %v260
    %v263 = vcvt.s32.f32 %v261
    %264 = vmin.xlane.f32.xlu0 %v263
    %v265 = vpop.xlane.xlu0 %264
    %vm266 = vcmp.eq.f32.partialorder %v263, %v265
    %v267 = vsel %vm266, %v262, inf
    %268 = vmin.xlane.f32.xlu0 %v267
    %v269 = vpop.xlane.xlu0 %268
    %v270 = vcvt.f32.s32 %v269
    %v271 = vcvt.f32.s32 %v265
    %v272 = vshll.u32 %v271, 16
    %v273 = vadd.s32 %v272, %v270
    %vm274 = vcmask 7168
    %275 = vst.msk [vmem:[%s11] sm:$0xff] %vm274, %v273
    %vm276 = vcmp.eq.s32.totalorder %v257, %v273
    %v277 = vsel %vm276, 1, 0
    %v278 = vcvt.s32.f32 %v277
    %v279 = vld [vmem:[%s6] sm:$0xff]
    %v280 = vld [vmem:[%s6 + $0x8] sm:$0xff]
    %v281 = vld [vmem:[%s6 + $0x10] sm:$0xff]
    %v282 = vld [vmem:[%s6 + $0x18] sm:$0xff]
    %v283 = vld [vmem:[%s6 + $0x20] sm:$0xff]
    %v284 = vld [vmem:[%s6 + $0x28] sm:$0xff]
    %v285 = vld [vmem:[%s6 + $0x30] sm:$0xff]
    %v286 = vld [vmem:[%s6 + $0x38] sm:$0xff]
    %v287 = vld [vmem:[%s6 + $0x40] sm:$0xff]
    %v288 = vld [vmem:[%s6 + $0x48] sm:$0xff]
    %v289 = vld [vmem:[%s6 + $0x50] sm:$0xff]
    %v290 = vld [vmem:[%s6 + $0x58] sm:$0xff]
    %v291 = vld [vmem:[%s6 + $0x60] sm:$0xff]
    %v292 = vld [vmem:[%s6 + $0x68] sm:$0xff]
    %v293 = vld [vmem:[%s6 + $0x70] sm:$0xff]
    %v294 = vld [vmem:[%s6 + $0x78] sm:$0xff]
    %295 = vmatpush.msra.mxu0 %v294
    %296 = vmatpush.msra.mxu0 %v293
    %297 = vmatpush.msra.mxu0 %v292
    %298 = vmatpush.msra.mxu0 %v291
    %299 = vmatpush.msra.mxu0 %v290
    %300 = vmatpush.msra.mxu0 %v289
    %301 = vmatpush.msra.mxu0 %v288
    %302 = vmatpush.msra.mxu0 %v287
    %303 = vmatpush.msra.mxu0 %v286
    %304 = vmatpush.msra.mxu0 %v285
    %305 = vmatpush.msra.mxu0 %v284
    %306 = vmatpush.msra.mxu0 %v283
    %307 = vmatpush.msra.mxu0 %v282
    %308 = vmatpush.msra.mxu0 %v281
    %309 = vmatpush.msra.mxu0 %v280
    %310 = vmatpush.msra.mxu0 %v279
    %311 = vmatmul.f32.gmra.mxu0 %v278
    %v312 = vpop.f32.mrf.mxu0
    %v313 = vadd.f32 0.0, %v312
    %314 = vdwg.mxu0
    %v315 = vld [vmem:[%s1 + $0x7] sm:$0x1]
    %v316 = vld [vmem:[%s1 + $0x8] sm:$0x1]
    %v317 = vld [vmem:[%s1 + $0x9] sm:$0x1]
    %v318 = vld [vmem:[%s1 + $0xa] sm:$0x1]
    %v319 = vld [vmem:[%s1 + $0xb] sm:$0x1]
    %v320 = vld [vmem:[%s1 + $0xc] sm:$0x1]
    %v321 = vld [vmem:[%s1 + $0xd] sm:$0x1]
    %v322 = vld [vmem:[%s7] sm:$0xff]
    %v323 = vld [vmem:[%s7 + $0x8] sm:$0xff]
    %v324 = vld [vmem:[%s7 + $0x10] sm:$0xff]
    %v325 = vld [vmem:[%s7 + $0x18] sm:$0xff]
    %v326 = vld [vmem:[%s7 + $0x20] sm:$0xff]
    %v327 = vld [vmem:[%s7 + $0x28] sm:$0xff]
    %v328 = vld [vmem:[%s7 + $0x30] sm:$0xff]
    %v329 = vld [vmem:[%s7 + $0x38] sm:$0xff]
    %v330 = vld [vmem:[%s7 + $0x40] sm:$0xff]
    %v331 = vld [vmem:[%s7 + $0x48] sm:$0xff]
    %v332 = vld [vmem:[%s7 + $0x50] sm:$0xff]
    %v333 = vld [vmem:[%s7 + $0x58] sm:$0xff]
    %v334 = vld [vmem:[%s7 + $0x60] sm:$0xff]
    %v335 = vld [vmem:[%s7 + $0x68] sm:$0xff]
    %v336 = vld [vmem:[%s7 + $0x70] sm:$0xff]
    %v337 = vld [vmem:[%s7 + $0x78] sm:$0xff]
    %v338 = vperm.slane %v315, 0
    %339 = vmatpush.msra.mxu0 %v337
    %340 = vmatpush.msra.mxu0 %v336
    %341 = vmatpush.msra.mxu0 %v335
    %342 = vmatpush.msra.mxu0 %v334
    %343 = vmatpush.msra.mxu0 %v333
    %344 = vmatpush.msra.mxu0 %v332
    %345 = vmatpush.msra.mxu0 %v331
    %346 = vmatpush.msra.mxu0 %v330
    %347 = vmatpush.msra.mxu0 %v329
    %348 = vmatpush.msra.mxu0 %v328
    %349 = vmatpush.msra.mxu0 %v327
    %350 = vmatpush.msra.mxu0 %v326
    %351 = vmatpush.msra.mxu0 %v325
    %352 = vmatpush.msra.mxu0 %v324
    %353 = vmatpush.msra.mxu0 %v323
    %354 = vmatpush.msra.mxu0 %v322
    %355 = vmatmul.f32.gmra.mxu0 %v313
    %v356 = vpop.f32.mrf.mxu0
    %v357 = vadd.f32 %v338, %v356
    %358 = vdwg.mxu0
    %359 = vadd.xlane.f32.xlu0 %v357
    %v360 = vpop.xlane.xlu0 %359
    %v361 = vmul.f32 %v360, 0.03125
    %v362 = vmul.f32 %v357, %v357
    %363 = vadd.xlane.f32.xlu0 %v362
    %v364 = vpop.xlane.xlu0 %363
    %v365 = vmul.f32 %v364, 0.03125
    %v366 = vmul.f32 %v361, %v361
    %v367 = vsub.f32 %v365, %v366
    %v368 = vmax.f32 %v367, 0.0
    %v369 = vsub.f32 %v357, %v361
    %v370 = vadd.f32 %v368, 1e-05
    %v371 = vrsqrt.pop %v370
    %v372 = vmul.f32 %v371, %v370
    %v373 = vmul.f32 %v372, %v371
    %v374 = vmul.f32 0.5, %v373
    %v375 = vsub.f32 1.5, %v374
    %v376 = vmul.f32 %v371, %v375
    %vm377 = vweird.f32 %v370
    %vm378 = vweird.f32 %v371
    %vm379 = vmor %vm377, %vm378
    %v380 = vsel %vm379, %v371, %v376
    %v381 = vmul.f32 %v369, %v380
    %v382 = vperm.slane %v316, 0
    %v383 = vmul.f32 %v381, %v382
    %v384 = vperm.slane %v317, 0
    %v385 = vadd.f32 %v383, %v384
    %v386 = vmax.f32 %v385, 0.0
    %v387 = vld [vmem:[%s8] sm:$0xff]
    %v388 = vld [vmem:[%s8 + $0x8] sm:$0xff]
    %v389 = vld [vmem:[%s8 + $0x10] sm:$0xff]
    %v390 = vld [vmem:[%s8 + $0x18] sm:$0xff]
    %v391 = vld [vmem:[%s8 + $0x20] sm:$0xff]
    %v392 = vld [vmem:[%s8 + $0x28] sm:$0xff]
    %v393 = vld [vmem:[%s8 + $0x30] sm:$0xff]
    %v394 = vld [vmem:[%s8 + $0x38] sm:$0xff]
    %v395 = vld [vmem:[%s8 + $0x40] sm:$0xff]
    %v396 = vld [vmem:[%s8 + $0x48] sm:$0xff]
    %v397 = vld [vmem:[%s8 + $0x50] sm:$0xff]
    %v398 = vld [vmem:[%s8 + $0x58] sm:$0xff]
    %v399 = vld [vmem:[%s8 + $0x60] sm:$0xff]
    %v400 = vld [vmem:[%s8 + $0x68] sm:$0xff]
    %v401 = vld [vmem:[%s8 + $0x70] sm:$0xff]
    %v402 = vld [vmem:[%s8 + $0x78] sm:$0xff]
    %v403 = vperm.slane %v318, 0
    %404 = vmatpush.msra.mxu0 %v402
    %405 = vmatpush.msra.mxu0 %v401
    %406 = vmatpush.msra.mxu0 %v400
    %407 = vmatpush.msra.mxu0 %v399
    %408 = vmatpush.msra.mxu0 %v398
    %409 = vmatpush.msra.mxu0 %v397
    %410 = vmatpush.msra.mxu0 %v396
    %411 = vmatpush.msra.mxu0 %v395
    %412 = vmatpush.msra.mxu0 %v394
    %413 = vmatpush.msra.mxu0 %v393
    %414 = vmatpush.msra.mxu0 %v392
    %415 = vmatpush.msra.mxu0 %v391
    %416 = vmatpush.msra.mxu0 %v390
    %417 = vmatpush.msra.mxu0 %v389
    %418 = vmatpush.msra.mxu0 %v388
    %419 = vmatpush.msra.mxu0 %v387
    %420 = vmatmul.f32.gmra.mxu0 %v386
    %v421 = vpop.f32.mrf.mxu0
    %v422 = vadd.f32 %v403, %v421
    %423 = vdwg.mxu0
    %424 = vadd.xlane.f32.xlu0 %v422
    %v425 = vpop.xlane.xlu0 %424
    %v426 = vmul.f32 %v425, 0.03125
    %v427 = vmul.f32 %v422, %v422
    %428 = vadd.xlane.f32.xlu0 %v427
    %v429 = vpop.xlane.xlu0 %428
    %v430 = vmul.f32 %v429, 0.03125
    %v431 = vmul.f32 %v426, %v426
    %v432 = vsub.f32 %v430, %v431
    %v433 = vmax.f32 %v432, 0.0
    %v434 = vsub.f32 %v422, %v426
    %v435 = vadd.f32 %v433, 1e-05
    %v436 = vrsqrt.pop %v435
    %v437 = vmul.f32 %v436, %v435
    %v438 = vmul.f32 %v437, %v436
    %v439 = vmul.f32 0.5, %v438
    %v440 = vsub.f32 1.5, %v439
    %v441 = vmul.f32 %v436, %v440
    %vm442 = vweird.f32 %v435
    %vm443 = vweird.f32 %v436
    %vm444 = vmor %vm442, %vm443
    %v445 = vsel %vm444, %v436, %v441
    %v446 = vmul.f32 %v434, %v445
    %v447 = vperm.slane %v319, 0
    %v448 = vmul.f32 %v446, %v447
    %v449 = vperm.slane %v320, 0
    %v450 = vadd.f32 %v448, %v449
    %v451 = vmax.f32 %v450, 0.0
    %v452 = vld [vmem:[%s9] sm:$0xff]
    %v453 = vld [vmem:[%s9 + $0x8] sm:$0xff]
    %v454 = vld [vmem:[%s9 + $0x10] sm:$0xff]
    %v455 = vld [vmem:[%s9 + $0x18] sm:$0xff]
    %v456 = vld [vmem:[%s9 + $0x20] sm:$0xff]
    %v457 = vld [vmem:[%s9 + $0x28] sm:$0xff]
    %v458 = vld [vmem:[%s9 + $0x30] sm:$0xff]
    %v459 = vld [vmem:[%s9 + $0x38] sm:$0xff]
    %v460 = vld [vmem:[%s9 + $0x40] sm:$0xff]
    %v461 = vld [vmem:[%s9 + $0x48] sm:$0xff]
    %v462 = vld [vmem:[%s9 + $0x50] sm:$0xff]
    %v463 = vld [vmem:[%s9 + $0x58] sm:$0xff]
    %v464 = vld [vmem:[%s9 + $0x60] sm:$0xff]
    %v465 = vld [vmem:[%s9 + $0x68] sm:$0xff]
    %v466 = vld [vmem:[%s9 + $0x70] sm:$0xff]
    %v467 = vld [vmem:[%s9 + $0x78] sm:$0xff]
    %v468 = vperm.slane %v321, 0
    %469 = vmatpush.msra.mxu0 %v467
    %470 = vmatpush.msra.mxu0 %v466
    %471 = vmatpush.msra.mxu0 %v465
    %472 = vmatpush.msra.mxu0 %v464
    %473 = vmatpush.msra.mxu0 %v463
    %474 = vmatpush.msra.mxu0 %v462
    %475 = vmatpush.msra.mxu0 %v461
    %476 = vmatpush.msra.mxu0 %v460
    %477 = vmatpush.msra.mxu0 %v459
    %478 = vmatpush.msra.mxu0 %v458
    %479 = vmatpush.msra.mxu0 %v457
    %480 = vmatpush.msra.mxu0 %v456
    %481 = vmatpush.msra.mxu0 %v455
    %482 = vmatpush.msra.mxu0 %v454
    %483 = vmatpush.msra.mxu0 %v453
    %484 = vmatpush.msra.mxu0 %v452
    %485 = vmatmul.f32.gmra.mxu0 %v451
    %v486 = vpop.f32.mrf.mxu0
    %v487 = vadd.f32 %v468, %v486
    %488 = vdwg.mxu0
    %489 = vst [vmem:[#allocation2] sm:$0xff] %v487
    %s490 = smul.u32 0, 8
    %v491 = vlaneseq
    %v492 = vshrl.u32 %v491, 7
    %v493 = vstv %s490
    %v494 = vadd.s32 %v493, %v492
    %vm495 = vcmp.lt.s32.totalorder %v494, 8
    %v496 = vsel %vm495, 1, 0
    %v497 = vcvt.s32.f32 %v496
    %v498 = vsub.f32 %v487, %v39
    %v499 = vsub.f32 %v212, %v313
    %v500 = vmul.f32 %v498, %v498
    %501 = vadd.xlane.f32.xlu0 %v500
    %v502 = vpop.xlane.xlu0 %501
    %v503 = vmul.f32 %v502, %v497
    %v504 = vsel %vm274, %v503, 0.0
    %505 = vadd.xlane.f32.xlu0 %v504
    %v506 = vpop.xlane.xlu0 %505
    %v507 = vrot.slane %v506, 4
    %v508 = vadd.f32 %v506, %v507
    %v509 = vrot.slane %v508, 2
    %v510 = vadd.f32 %v508, %v509
    %v511 = vrot.slane %v510, 1
    %v512 = vadd.f32 %v510, %v511
    %s513 = vtos %v512
    %v514 = vmul.f32 %v499, %v499
    %515 = vadd.xlane.f32.xlu0 %v514
    %v516 = vpop.xlane.xlu0 %515
    %v517 = vmul.f32 %v516, %v497
    %v518 = vsel %vm274, %v517, 0.0
    %519 = vadd.xlane.f32.xlu0 %v518
    %v520 = vpop.xlane.xlu0 %519
    %v521 = vrot.slane %v520, 4
    %v522 = vadd.f32 %v520, %v521
    %v523 = vrot.slane %v522, 2
    %v524 = vadd.f32 %v522, %v523
    %v525 = vrot.slane %v524, 1
    %v526 = vadd.f32 %v524, %v525
    %s527 = vtos %v526
    %vm528 = vcmp.eq.s32.totalorder %v257, 0
    %vm529 = vcmp.eq.s32.totalorder %v257, 1
    %v530 = vstv %s527
    %v531 = vsel %vm529, %v530, 0.0
    %v532 = vstv %s513
    %v533 = vsel %vm528, %v532, %v531
    %534 = vst [vmem:[%s12] sm:$0xff] %v533
    // Predicated region
    $region42: #{vqvae_forward.1} parent=1 // pred_check
      _
    $region43: #{vqvae_forward.1} parent=1 // pred_check_branch
      %536 = sbr.rel (0) target = $region45
    $region44: #{vqvae_forward.1} parent=1 // pred_region
      %538 = vsyncadd [#allocation3], 0
      %s540 = sshll.u32 [#allocation2], 4
      %s541 = int_to_ptr.vmem [resolvable:$true] %s540
      %s542 = sshll.u32 %s10, 4
      %s543 = int_to_ptr.hbm [resolvable:$true] %s542
      %545 = dma.vmem_to_hbm [thread:$0]  %s541, 128, %s543, [#allocation3]
    $region45: #{vqvae_forward.1} parent=1 // pred_fallthru
      _
    // Predicated region
    $region46: #{vqvae_forward.1} parent=1 // pred_check
      _
    $region47: #{vqvae_forward.1} parent=1 // pred_check_branch
      %547 = sbr.rel (0) target = $region49
    $region48: #{vqvae_forward.1} parent=1 // pred_region
      _
    $region49: #{vqvae_forward.1} parent=1 // pred_fallthru
      _
    // Predicated region
    $region50: #{vqvae_forward.1} parent=1 // pred_check
      _
    $region51: #{vqvae_forward.1} parent=1 // pred_check_branch
      %549 = sbr.rel (0) target = $region53
    $region52: #{vqvae_forward.1} parent=1 // pred_region
      _
    $region53: #{vqvae_forward.1} parent=1 // pred_fallthru
      _
    // Predicated region
    $region54: #{vqvae_forward.1} parent=1 // pred_check
      _
    $region55: #{vqvae_forward.1} parent=1 // pred_check_branch
      %551 = sbr.rel (0) target = $region57
    $region56: #{vqvae_forward.1} parent=1 // pred_region
      %553 = dma.done [#allocation3], 128
    $region57: #{vqvae_forward.1} parent=1 // pred_fallthru
      _
    // Predicated region
    $region58: #{vqvae_forward.1} parent=1 // pred_check
      _
    $region59: #{vqvae_forward.1} parent=1 // pred_check_branch
      %555 = sbr.rel (0) target = $region61
    $region60: #{vqvae_forward.1} parent=1 // pred_region
      _
    $region61: #{vqvae_forward.1} parent=1 // pred_fallthru
      _
    // Predicated region
    $region62: #{vqvae_forward.1} parent=1 // pred_check
      _
    $region63: #{vqvae_forward.1} parent=1 // pred_check_branch
      %557 = sbr.rel (0) target = $region65
    $region64: #{vqvae_forward.1} parent=1 // pred_region
      _
    $region65: #{vqvae_forward.1} parent=1 // pred_fallthru
      _
    %558 = vsyncpa [#allocation3], 1

</llo_original>
